<compile_context>
chip_gen: v6e
topology: v6e:2x2x1
jax: 0.10.0
libtpu: 0.0.40
codegen_flags: <defaults>
</compile_context>

<pallas_src>
import math

import jax
import jax.numpy as jnp
from jax.experimental import pallas as pl
from jax.experimental.pallas import tpu as pltpu


def _mhl_kernel(x_ref, w_ref, o_ref):
    """x_ref: (TM, H, I), w_ref: (H, I, O), o_ref: (TM, H, O)."""
    num_head = w_ref.shape[0]
    for h in range(num_head):              # static unroll over heads
        xh = x_ref[:, h, :]                # (TM, I)
        wh = w_ref[h]                      # (I, O)
        o_ref[:, h, :] = jnp.dot(
            xh, wh, preferred_element_type=jnp.float32
        ).astype(o_ref.dtype)


def _choose_tm(M, H, I, O, x_bytes, o_bytes, w_bytes,
               vmem_budget_bytes=12 * 1024 * 1024):
    """Largest M-tile whose double-buffered in/out blocks plus the resident
    weight stay inside a conservative VMEM budget (safe on v5e/v6e/v7x
    default scoped-VMEM limits)."""
    weight_bytes = H * I * O * w_bytes
    per_row = 2 * H * (I * x_bytes + O * o_bytes)   # 2x = double buffering
    avail = max(vmem_budget_bytes - weight_bytes, per_row)
    tm = max(1, avail // per_row)
    tm = min(tm, 1024, M)                  # cap for pipeline granularity
    if tm >= 8:
        tm = (tm // 8) * 8                 # keep leading dim sublane-friendly
    return int(tm)


def multi_head_linear(x, weight):
    """Pallas TPU implementation of MultiHeadLinear.forward.

    x: (S, H, I) or (B, S, H, I);  weight: (H, I, O)
    returns: (S, H, O) or (B, S, H, O)
    """
    if x.ndim == 3:
        squeeze_batch = True
        x4 = x[None]                       # (1, S, H, I)
    elif x.ndim == 4:
        squeeze_batch = False
        x4 = x
    else:
        raise ValueError("x dim should be 3 or 4")

    B, S, H, I = x4.shape
    Hw, Iw, O = weight.shape
    assert H == Hw and I == Iw, "weight shape mismatch"

    out_dtype = jnp.result_type(x.dtype, weight.dtype)

    M = B * S
    x_m = x4.reshape(M, H, I)              # contiguous -> free, no transpose

    tm = _choose_tm(
        M, H, I, O,
        jnp.dtype(x.dtype).itemsize,
        jnp.dtype(out_dtype).itemsize,
        jnp.dtype(weight.dtype).itemsize,
    )
    grid = (pl.cdiv(M, tm),)               # ragged last tile is masked by Pallas

    out_m = pl.pallas_call(
        _mhl_kernel,
        out_shape=jax.ShapeDtypeStruct((M, H, O), out_dtype),
        grid=grid,
        in_specs=[
            # x tile: last two dims equal the full (H, I) extents -> (8,128) ok.
            pl.BlockSpec((tm, H, I), lambda m: (m, 0, 0)),
            # weight: constant block index -> fetched once, stays VMEM-resident.
            pl.BlockSpec((H, I, O), lambda m: (0, 0, 0)),
        ],
        out_specs=pl.BlockSpec((tm, H, O), lambda m: (m, 0, 0)),
        compiler_params=pltpu.CompilerParams(
            dimension_semantics=("parallel",),
        ),
    )(x_m, weight)

    out = out_m.reshape(B, S, H, O)        # free reshape back
    if squeeze_batch:
        out = out[0]
    return out


def init_multi_head_linear_weight(key, num_head, in_channel, hidden_size,
                                  dtype=jnp.float32):
    # xavier_uniform_ on a 3D tensor (H, I, O):
    #   fan_in  = I * O   (size(1) * receptive_field)
    #   fan_out = H * O   (size(0) * receptive_field)
    fan_in = in_channel * hidden_size
    fan_out = num_head * hidden_size
    bound = math.sqrt(6.0 / (fan_in + fan_out))
    return jax.random.uniform(
        key, (num_head, in_channel, hidden_size), dtype=dtype,
        minval=-bound, maxval=bound)


if __name__ == "__main__":
    key = jax.random.PRNGKey(0)
    k_x, k_w = jax.random.split(key)

    B, S, H, I, O = 2, 8, 4, 16, 32  # batch, seq, num_head, in_channel, hidden

    x = jax.random.normal(k_x, (B, S, H, I), dtype=jnp.float32)
    weight = init_multi_head_linear_weight(k_w, H, I, O)

    # 4D path
    out = jax.block_until_ready(multi_head_linear(x, weight))
    ref = jnp.einsum("bshi,hio->bsho", x, weight)
    assert out.shape == (B, S, H, O)
    assert jnp.allclose(out, ref, atol=1e-5, rtol=1e-5)

    # 3D path
    out3 = jax.block_until_ready(multi_head_linear(x[0], weight))
    ref3 = jnp.einsum("shi,hio->sho", x[0], weight)
    assert out3.shape == (S, H, O)
    assert jnp.allclose(out3, ref3, atol=1e-5, rtol=1e-5)

    print("KERNEL_OK")
</pallas_src>

<mosaic_0001>
module attributes {stable_mosaic.version = 11 : i64} {
  func.func @_mhl_kernel(%arg0: i32, %arg1: memref<16x4x16xf32, #tpu.memory_space<vmem>>, %arg2: memref<4x16x32xf32, #tpu.memory_space<vmem>>, %arg3: memref<16x4x32xf32, #tpu.memory_space<vmem>>) attributes {dimension_semantics = [#tpu.dimension_semantics<parallel>], iteration_bounds = array<i64: 1>, scalar_prefetch = 0 : i64, scratch_operands = 0 : i64, tpu.core_type = #tpu.core_type<tc>, window_params = [{transform_indices = @transform_0, window_bounds = array<i64: 16, 4, 16>}, {pipeline_mode = #tpu.pipeline_mode<synchronous>, transform_indices = @transform_1, window_bounds = array<i64: 4, 16, 32>}, {transform_indices = @transform_2, window_bounds = array<i64: 16, 4, 32>}]} {
    %c0 = arith.constant 0 : index
    %c0_0 = arith.constant 0 : index
    %c0_1 = arith.constant 0 : index
    %0 = vector.load %arg1[%c0, %c0_0, %c0_1] : memref<16x4x16xf32, #tpu.memory_space<vmem>>, vector<16x1x16xf32>
    %1 = vector.shape_cast %0 : vector<16x1x16xf32> to vector<16x16xf32>
    %c0_2 = arith.constant 0 : index
    %c0_3 = arith.constant 0 : index
    %c0_4 = arith.constant 0 : index
    %2 = vector.load %arg2[%c0_2, %c0_3, %c0_4] : memref<4x16x32xf32, #tpu.memory_space<vmem>>, vector<1x16x32xf32>
    %3 = vector.shape_cast %2 : vector<1x16x32xf32> to vector<16x32xf32>
    %cst = arith.constant dense<0.000000e+00> : vector<16x32xf32>
    %4 = tpu.matmul %1, %3, %cst {dimension_numbers = #tpu.dot_dimension_numbers<[1], [0], [0], [1], [0, 0, 1, 1], [], []>} : vector<16x16xf32>, vector<16x32xf32>, vector<16x32xf32> -> vector<16x32xf32>
    %c0_5 = arith.constant 0 : index
    %c0_6 = arith.constant 0 : index
    %c0_7 = arith.constant 0 : index
    %5 = vector.load %arg3[%c0_5, %c0_6, %c0_7] : memref<16x4x32xf32, #tpu.memory_space<vmem>>, vector<16x1x32xf32>
    %6 = vector.shape_cast %5 : vector<16x1x32xf32> to vector<16x32xf32>
    %7 = vector.shape_cast %4 : vector<16x32xf32> to vector<16x1x32xf32>
    tpu.vector_store %arg3[%c0_5, %c0_6, %c0_7], %7 {strides = array<i32>} : memref<16x4x32xf32, #tpu.memory_space<vmem>>, vector<16x1x32xf32>,
    %c0_8 = arith.constant 0 : index
    %c1 = arith.constant 1 : index
    %c0_9 = arith.constant 0 : index
    %8 = vector.load %arg1[%c0_8, %c1, %c0_9] : memref<16x4x16xf32, #tpu.memory_space<vmem>>, vector<16x1x16xf32>
    %9 = vector.shape_cast %8 : vector<16x1x16xf32> to vector<16x16xf32>
    %c1_10 = arith.constant 1 : index
    %c0_11 = arith.constant 0 : index
    %c0_12 = arith.constant 0 : index
    %10 = vector.load %arg2[%c1_10, %c0_11, %c0_12] : memref<4x16x32xf32, #tpu.memory_space<vmem>>, vector<1x16x32xf32>
    %11 = vector.shape_cast %10 : vector<1x16x32xf32> to vector<16x32xf32>
    %cst_13 = arith.constant dense<0.000000e+00> : vector<16x32xf32>
    %12 = tpu.matmul %9, %11, %cst_13 {dimension_numbers = #tpu.dot_dimension_numbers<[1], [0], [0], [1], [0, 0, 1, 1], [], []>} : vector<16x16xf32>, vector<16x32xf32>, vector<16x32xf32> -> vector<16x32xf32>
    %c0_14 = arith.constant 0 : index
    %c1_15 = arith.constant 1 : index
    %c0_16 = arith.constant 0 : index
    %13 = vector.load %arg3[%c0_14, %c1_15, %c0_16] : memref<16x4x32xf32, #tpu.memory_space<vmem>>, vector<16x1x32xf32>
    %14 = vector.shape_cast %13 : vector<16x1x32xf32> to vector<16x32xf32>
    %15 = vector.shape_cast %12 : vector<16x32xf32> to vector<16x1x32xf32>
    tpu.vector_store %arg3[%c0_14, %c1_15, %c0_16], %15 {strides = array<i32>} : memref<16x4x32xf32, #tpu.memory_space<vmem>>, vector<16x1x32xf32>,
    %c0_17 = arith.constant 0 : index
    %c2 = arith.constant 2 : index
    %c0_18 = arith.constant 0 : index
    %16 = vector.load %arg1[%c0_17, %c2, %c0_18] : memref<16x4x16xf32, #tpu.memory_space<vmem>>, vector<16x1x16xf32>
    %17 = vector.shape_cast %16 : vector<16x1x16xf32> to vector<16x16xf32>
    %c2_19 = arith.constant 2 : index
    %c0_20 = arith.constant 0 : index
    %c0_21 = arith.constant 0 : index
    %18 = vector.load %arg2[%c2_19, %c0_20, %c0_21] : memref<4x16x32xf32, #tpu.memory_space<vmem>>, vector<1x16x32xf32>
    %19 = vector.shape_cast %18 : vector<1x16x32xf32> to vector<16x32xf32>
    %cst_22 = arith.constant dense<0.000000e+00> : vector<16x32xf32>
    %20 = tpu.matmul %17, %19, %cst_22 {dimension_numbers = #tpu.dot_dimension_numbers<[1], [0], [0], [1], [0, 0, 1, 1], [], []>} : vector<16x16xf32>, vector<16x32xf32>, vector<16x32xf32> -> vector<16x32xf32>
    %c0_23 = arith.constant 0 : index
    %c2_24 = arith.constant 2 : index
    %c0_25 = arith.constant 0 : index
    %21 = vector.load %arg3[%c0_23, %c2_24, %c0_25] : memref<16x4x32xf32, #tpu.memory_space<vmem>>, vector<16x1x32xf32>
    %22 = vector.shape_cast %21 : vector<16x1x32xf32> to vector<16x32xf32>
    %23 = vector.shape_cast %20 : vector<16x32xf32> to vector<16x1x32xf32>
    tpu.vector_store %arg3[%c0_23, %c2_24, %c0_25], %23 {strides = array<i32>} : memref<16x4x32xf32, #tpu.memory_space<vmem>>, vector<16x1x32xf32>,
    %c0_26 = arith.constant 0 : index
    %c3 = arith.constant 3 : index
    %c0_27 = arith.constant 0 : index
    %24 = vector.load %arg1[%c0_26, %c3, %c0_27] : memref<16x4x16xf32, #tpu.memory_space<vmem>>, vector<16x1x16xf32>
    %25 = vector.shape_cast %24 : vector<16x1x16xf32> to vector<16x16xf32>
    %c3_28 = arith.constant 3 : index
    %c0_29 = arith.constant 0 : index
    %c0_30 = arith.constant 0 : index
    %26 = vector.load %arg2[%c3_28, %c0_29, %c0_30] : memref<4x16x32xf32, #tpu.memory_space<vmem>>, vector<1x16x32xf32>
    %27 = vector.shape_cast %26 : vector<1x16x32xf32> to vector<16x32xf32>
    %cst_31 = arith.constant dense<0.000000e+00> : vector<16x32xf32>
    %28 = tpu.matmul %25, %27, %cst_31 {dimension_numbers = #tpu.dot_dimension_numbers<[1], [0], [0], [1], [0, 0, 1, 1], [], []>} : vector<16x16xf32>, vector<16x32xf32>, vector<16x32xf32> -> vector<16x32xf32>
    %c0_32 = arith.constant 0 : index
    %c3_33 = arith.constant 3 : index
    %c0_34 = arith.constant 0 : index
    %29 = vector.load %arg3[%c0_32, %c3_33, %c0_34] : memref<16x4x32xf32, #tpu.memory_space<vmem>>, vector<16x1x32xf32>
    %30 = vector.shape_cast %29 : vector<16x1x32xf32> to vector<16x32xf32>
    %31 = vector.shape_cast %28 : vector<16x32xf32> to vector<16x1x32xf32>
    tpu.vector_store %arg3[%c0_32, %c3_33, %c0_34], %31 {strides = array<i32>} : memref<16x4x32xf32, #tpu.memory_space<vmem>>, vector<16x1x32xf32>,
    return
  }
  func.func @transform_0(%arg0: i32) -> (i32, i32, i32) {
    %c0_i32 = arith.constant 0 : i32
    %c0_i32_0 = arith.constant 0 : i32
    %c0_i32_1 = arith.constant 0 : i32
    return %arg0, %c0_i32, %c0_i32_0 : i32, i32, i32
  }
  func.func @transform_1(%arg0: i32) -> (i32, i32, i32) {
    %c0_i32 = arith.constant 0 : i32
    %c0_i32_0 = arith.constant 0 : i32
    %c0_i32_1 = arith.constant 0 : i32
    %c0_i32_2 = arith.constant 0 : i32
    return %c0_i32, %c0_i32_0, %c0_i32_1 : i32, i32, i32
  }
  func.func @transform_2(%arg0: i32) -> (i32, i32, i32) {
    %c0_i32 = arith.constant 0 : i32
    %c0_i32_0 = arith.constant 0 : i32
    %c0_i32_1 = arith.constant 0 : i32
    return %arg0, %c0_i32, %c0_i32_0 : i32, i32, i32
  }
}

</mosaic_0001>

<llo_original>
// kernel: tpu_custom_call.1
$region0: #{tpu_custom_call.1}
  #allocation0 [shape = 'u32[]', space=smem, size = 0x4, offset = 0x4, fixed_abs, tag = 'smem constant byte address 0x4 - core index']
  #allocation1 [shape = 'u32[144,128]{1,0:T(1,128)}', space=vmem, size = 0x12000, scoped, tag = 'internal scratch']
  %s0 = inlined_call_operand.hbm [shape: f32[16,4,16], index: 0, kind: input, shape index: {}]
  %s1 = inlined_call_operand.hbm [shape: f32[4,16,32], index: 1, kind: input, shape index: {}]
  %s2 = inlined_call_operand.hbm [shape: f32[16,4,32], index: 2, kind: output, shape index: {}]
  %s3 = sld [smem:[#allocation0]]
  $region26: #{tpu_custom_call.1} parent=0
    _
  %s5 = ssub.s32 1, %s3
  %s6 = scalar_select 0, %s5, %s3
  $region1: #{tpu_custom_call.1} parent=0
    #allocation2 [shape = 'u8[32768]{0}', space=vmem, size = 0x8000, scoped, tag = 'input window, operand 0, single buffered']
    #allocation3 [shape = 's32[1]{0}', space=sflag, size = 0x4, scoped, tag = 'scoped memory for tpu_custom_call.1']
    #allocation4 [shape = 's32[1]{0}', space=sflag, size = 0x4, scoped, tag = 'scoped memory for tpu_custom_call.1']
    #allocation5 [shape = 'u8[32768]{0}', space=vmem, size = 0x8000, scoped, tag = 'input window, operand 1, single buffered']
    #allocation6 [shape = 's32[1]{0}', space=sflag, size = 0x4, scoped, tag = 'scoped memory for tpu_custom_call.1']
    #allocation7 [shape = 'u8[32768]{0}', space=vmem, size = 0x8000, scoped, tag = 'output window, operand 0, single buffered']
    %7 = vsyncpa [#allocation3], 0
    %8 = vsyncpa [#allocation6], 0
    %9 = vsyncpa [#allocation4], 0
    // Predicated region
    $region2: #{tpu_custom_call.1} parent=1 // pred_check
      _
    $region3: #{tpu_custom_call.1} parent=1 // pred_check_branch
      %11 = sbr.rel (0) target = $region5
    $region4: #{tpu_custom_call.1} parent=1 // pred_region
      %s13 = ssub.s32 1024, 1024
      %14 = vsyncadd [#allocation3], %s13
      %s15 = sshll.u32 [#allocation2], 4
      %s16 = int_to_ptr.vmem [resolvable:$true] %s15
      %21 = dma.hbm_to_vmem [thread:$0]  %s0, 1024, %s16, [#allocation3], 64, 64, 4
    $region5: #{tpu_custom_call.1} parent=1 // pred_fallthru
      _
    // Predicated region
    $region6: #{tpu_custom_call.1} parent=1 // pred_check
      _
    $region7: #{tpu_custom_call.1} parent=1 // pred_check_branch
      %23 = sbr.rel (0) target = $region9
    $region8: #{tpu_custom_call.1} parent=1 // pred_region
      %s25 = ssub.s32 1024, 1024
      %26 = vsyncadd [#allocation6], %s25
      %s27 = sshll.u32 [#allocation5], 4
      %s28 = int_to_ptr.vmem [resolvable:$true] %s27
      %33 = dma.hbm_to_vmem [thread:$0]  %s1, 1024, %s28, [#allocation6], 128, 128, 8
    $region9: #{tpu_custom_call.1} parent=1 // pred_fallthru
      _
    // Predicated region
    $region10: #{tpu_custom_call.1} parent=1 // pred_check
      _
    $region11: #{tpu_custom_call.1} parent=1 // pred_check_branch
      %35 = sbr.rel (0) target = $region13
    $region12: #{tpu_custom_call.1} parent=1 // pred_region
      %36 = dma.done [#allocation3], 1024
    $region13: #{tpu_custom_call.1} parent=1 // pred_fallthru
      _
    // Predicated region
    $region14: #{tpu_custom_call.1} parent=1 // pred_check
      _
    $region15: #{tpu_custom_call.1} parent=1 // pred_check_branch
      %38 = sbr.rel (0) target = $region17
    $region16: #{tpu_custom_call.1} parent=1 // pred_region
      %39 = dma.done [#allocation6], 1024
    $region17: #{tpu_custom_call.1} parent=1 // pred_fallthru
      _
    %v40 = vld [vmem:[#allocation2] sm:$0x1]
    %v41 = vld [vmem:[#allocation2 + $0x4] sm:$0x1]
    %v42 = vld [vmem:[#allocation2 + $0x8] sm:$0x1]
    %v43 = vld [vmem:[#allocation2 + $0xc] sm:$0x1]
    %v44 = vld [vmem:[#allocation2 + $0x10] sm:$0x1]
    %v45 = vld [vmem:[#allocation2 + $0x14] sm:$0x1]
    %v46 = vld [vmem:[#allocation2 + $0x18] sm:$0x1]
    %v47 = vld [vmem:[#allocation2 + $0x1c] sm:$0x1]
    %v48 = vld [vmem:[#allocation2 + $0x20] sm:$0x1]
    %v49 = vld [vmem:[#allocation2 + $0x24] sm:$0x1]
    %v50 = vld [vmem:[#allocation2 + $0x28] sm:$0x1]
    %v51 = vld [vmem:[#allocation2 + $0x2c] sm:$0x1]
    %v52 = vld [vmem:[#allocation2 + $0x30] sm:$0x1]
    %v53 = vld [vmem:[#allocation2 + $0x34] sm:$0x1]
    %v54 = vld [vmem:[#allocation2 + $0x38] sm:$0x1]
    %v55 = vld [vmem:[#allocation2 + $0x3c] sm:$0x1]
    %v56 = vld [vmem:[#allocation5] sm:$0xff]
    %v57 = vld [vmem:[#allocation5 + $0x8] sm:$0xff]
    %v74 = vrot.slane %v41, 7
    %vm75 = vcmask 1041409
    %v76 = vsel %vm75, %v74, %v40
    %v77 = vrot.slane %v42, 6
    %vm78 = vcmask 1042434
    %v79 = vsel %vm78, %v77, %v76
    %v80 = vrot.slane %v43, 5
    %vm81 = vcmask 1043459
    %v82 = vsel %vm81, %v80, %v79
    %v83 = vrot.slane %v44, 4
    %vm84 = vcmask 1044484
    %v85 = vsel %vm84, %v83, %v82
    %v86 = vrot.slane %v45, 3
    %vm87 = vcmask 1045509
    %v88 = vsel %vm87, %v86, %v85
    %v89 = vrot.slane %v46, 2
    %vm90 = vcmask 1046534
    %v91 = vsel %vm90, %v89, %v88
    %v92 = vrot.slane %v47, 1
    %vm93 = vcmask 1047559
    %v94 = vsel %vm93, %v92, %v91
    %v95 = vrot.slane %v49, 7
    %v96 = vsel %vm75, %v95, %v48
    %v97 = vrot.slane %v50, 6
    %v98 = vsel %vm78, %v97, %v96
    %v99 = vrot.slane %v51, 5
    %v100 = vsel %vm81, %v99, %v98
    %v101 = vrot.slane %v52, 4
    %v102 = vsel %vm84, %v101, %v100
    %v103 = vrot.slane %v53, 3
    %v104 = vsel %vm87, %v103, %v102
    %v105 = vrot.slane %v54, 2
    %v106 = vsel %vm90, %v105, %v104
    %v107 = vrot.slane %v55, 1
    %v108 = vsel %vm93, %v107, %v106
    %vm109 = vcmask 130048
    %v110 = vsel %vm109, %v94, 0
    %v112 = vsel %vm109, %v108, 0
    %114 = vmatprep.subr.mxu0 0.0
    %115 = vmatpush1.msra.mxu0 0.0
    %116 = vmatprep.subr.mxu0 0.0
    %117 = vmatpush1.msra.mxu0 0.0
    %118 = vmatprep.subr.mxu0 0.0
    %119 = vmatpush1.msra.mxu0 0.0
    %120 = vmatprep.subr.mxu0 0.0
    %121 = vmatpush1.msra.mxu0 0.0
    %122 = vmatprep.subr.mxu0 0.0
    %123 = vmatpush1.msra.mxu0 0.0
    %124 = vmatprep.subr.mxu0 0.0
    %125 = vmatpush1.msra.mxu0 0.0
    %126 = vmatprep.subr.mxu0 0.0
    %127 = vmatpush1.msra.mxu0 0.0
    %128 = vmatprep.subr.mxu0 0.0
    %129 = vmatpush1.msra.mxu0 0.0
    %130 = vmatprep.subr.mxu0 0.0
    %131 = vmatpush1.msra.mxu0 0.0
    %132 = vmatprep.subr.mxu0 0.0
    %133 = vmatpush1.msra.mxu0 0.0
    %134 = vmatprep.subr.mxu0 0.0
    %135 = vmatpush1.msra.mxu0 0.0
    %136 = vmatprep.subr.mxu0 0.0
    %137 = vmatpush1.msra.mxu0 0.0
    %138 = vmatprep.subr.mxu0 0.0
    %139 = vmatpush1.msra.mxu0 0.0
    %140 = vmatprep.subr.mxu0 0.0
    %141 = vmatpush1.msra.mxu0 0.0
    %142 = vmatprep.subr.mxu0 0.0
    %143 = vmatpush1.msra.mxu0 %v57
    %144 = vmatprep.subr.mxu0 0.0
    %145 = vmatpush1.msra.mxu0 %v56
    %146 = vmatprep.subr.mxu0 0.0
    %147 = vmatpush2.msra.mxu0 0.0
    %148 = vmatprep.subr.mxu0 0.0
    %149 = vmatpush2.msra.mxu0 0.0
    %150 = vmatprep.subr.mxu0 0.0
    %151 = vmatpush2.msra.mxu0 0.0
    %152 = vmatprep.subr.mxu0 0.0
    %153 = vmatpush2.msra.mxu0 0.0
    %154 = vmatprep.subr.mxu0 0.0
    %155 = vmatpush2.msra.mxu0 0.0
    %156 = vmatprep.subr.mxu0 0.0
    %157 = vmatpush2.msra.mxu0 0.0
    %158 = vmatprep.subr.mxu0 0.0
    %159 = vmatpush2.msra.mxu0 0.0
    %160 = vmatprep.subr.mxu0 0.0
    %161 = vmatpush2.msra.mxu0 0.0
    %162 = vmatprep.subr.mxu0 0.0
    %163 = vmatpush2.msra.mxu0 0.0
    %164 = vmatprep.subr.mxu0 0.0
    %165 = vmatpush2.msra.mxu0 0.0
    %166 = vmatprep.subr.mxu0 0.0
    %167 = vmatpush2.msra.mxu0 0.0
    %168 = vmatprep.subr.mxu0 0.0
    %169 = vmatpush2.msra.mxu0 0.0
    %170 = vmatprep.subr.mxu0 0.0
    %171 = vmatpush2.msra.mxu0 0.0
    %172 = vmatprep.subr.mxu0 0.0
    %173 = vmatpush2.msra.mxu0 0.0
    %174 = vmatprep.subr.mxu0 0.0
    %175 = vmatpush2.msra.mxu0 0.0
    %176 = vmatprep.subr.mxu0 0.0
    %177 = vmatpush2.msra.mxu0 0.0
    %178 = vmatprep.mubr.f32.mxu0 0.0
    %179 = vmatmul.mubr.f32.gmra.mxu0 %v110
    %v180 = vpop.f32.mrf.mxu0
    %v181 = vadd.f32 0.0, %v180
    %v182 = vpop.f32.mrf.mxu0
    %183 = vmatprep.mubr.f32.mxu0 0.0
    %184 = vmatmul.mubr.f32.gmra.mxu0 %v112
    %v185 = vpop.f32.mrf.mxu0
    %v186 = vadd.f32 0.0, %v185
    %v187 = vpop.f32.mrf.mxu0
    %188 = vdwg.mxu0
    %v191 = vcombine.high %v181, %v181
    %v193 = vunpack.c.l.s4 1966171168
    %v194 = vunpack.c.0.s8 %v193
    %v195 = vlaneseq
    %v196 = vshrl.u32 %v195, 7
    %v197 = vsub.s32 %v194, %v196
    %v198 = vrot.slane %v181, %v197
    %v200 = vunpack.c.l.s4 1966171168
    %v201 = vunpack.c.0.s8 %v200
    %v202 = vlaneseq
    %v203 = vshrl.u32 %v202, 7
    %v204 = vsub.s32 %v201, %v203
    %v205 = vrot.slane %v191, %v204
    %v206 = vcombine.high %v198, %v198
    %v207 = vcombine.high %v205, %v205
    %v209 = vunpack.c.l.s4 1966171168
    %v210 = vunpack.c.0.s8 %v209
    %v211 = vlaneseq
    %v212 = vshrl.u32 %v211, 7
    %v213 = vsub.s32 %v210, %v212
    %v214 = vrot.slane %v198, %v213
    %v216 = vunpack.c.l.s4 1966171168
    %v217 = vunpack.c.0.s8 %v216
    %v218 = vlaneseq
    %v219 = vshrl.u32 %v218, 7
    %v220 = vsub.s32 %v217, %v219
    %v221 = vrot.slane %v205, %v220
    %v223 = vunpack.c.l.s4 1966171168
    %v224 = vunpack.c.0.s8 %v223
    %v225 = vlaneseq
    %v226 = vshrl.u32 %v225, 7
    %v227 = vsub.s32 %v224, %v226
    %v228 = vrot.slane %v206, %v227
    %v230 = vunpack.c.l.s4 1966171168
    %v231 = vunpack.c.0.s8 %v230
    %v232 = vlaneseq
    %v233 = vshrl.u32 %v232, 7
    %v234 = vsub.s32 %v231, %v233
    %v235 = vrot.slane %v207, %v234
    %v236 = vcombine.high %v214, %v214
    %v237 = vcombine.high %v221, %v221
    %v238 = vcombine.high %v228, %v228
    %v239 = vcombine.high %v235, %v235
    %v240 = vcombine.high %v186, %v186
    %v242 = vunpack.c.l.s4 1966171168
    %v243 = vunpack.c.0.s8 %v242
    %v244 = vlaneseq
    %v245 = vshrl.u32 %v244, 7
    %v246 = vsub.s32 %v243, %v245
    %v247 = vrot.slane %v186, %v246
    %v249 = vunpack.c.l.s4 1966171168
    %v250 = vunpack.c.0.s8 %v249
    %v251 = vlaneseq
    %v252 = vshrl.u32 %v251, 7
    %v253 = vsub.s32 %v250, %v252
    %v254 = vrot.slane %v240, %v253
    %v255 = vcombine.high %v247, %v247
    %v256 = vcombine.high %v254, %v254
    %v258 = vunpack.c.l.s4 1966171168
    %v259 = vunpack.c.0.s8 %v258
    %v260 = vlaneseq
    %v261 = vshrl.u32 %v260, 7
    %v262 = vsub.s32 %v259, %v261
    %v263 = vrot.slane %v247, %v262
    %v265 = vunpack.c.l.s4 1966171168
    %v266 = vunpack.c.0.s8 %v265
    %v267 = vlaneseq
    %v268 = vshrl.u32 %v267, 7
    %v269 = vsub.s32 %v266, %v268
    %v270 = vrot.slane %v254, %v269
    %v272 = vunpack.c.l.s4 1966171168
    %v273 = vunpack.c.0.s8 %v272
    %v274 = vlaneseq
    %v275 = vshrl.u32 %v274, 7
    %v276 = vsub.s32 %v273, %v275
    %v277 = vrot.slane %v255, %v276
    %v279 = vunpack.c.l.s4 1966171168
    %v280 = vunpack.c.0.s8 %v279
    %v281 = vlaneseq
    %v282 = vshrl.u32 %v281, 7
    %v283 = vsub.s32 %v280, %v282
    %v284 = vrot.slane %v256, %v283
    %v285 = vcombine.high %v263, %v263
    %v286 = vcombine.high %v270, %v270
    %v287 = vcombine.high %v277, %v277
    %v288 = vcombine.high %v284, %v284
    %vm305 = vcmask 253952
    %306 = vst.msk [vmem:[#allocation7] sm:$0x1] %vm305, %v214
    %307 = vst.msk [vmem:[#allocation7 + $0x4] sm:$0x1] %vm305, %v228
    %308 = vst.msk [vmem:[#allocation7 + $0x8] sm:$0x1] %vm305, %v236
    %309 = vst.msk [vmem:[#allocation7 + $0xc] sm:$0x1] %vm305, %v238
    %310 = vst.msk [vmem:[#allocation7 + $0x10] sm:$0x1] %vm305, %v221
    %311 = vst.msk [vmem:[#allocation7 + $0x14] sm:$0x1] %vm305, %v235
    %312 = vst.msk [vmem:[#allocation7 + $0x18] sm:$0x1] %vm305, %v237
    %313 = vst.msk [vmem:[#allocation7 + $0x1c] sm:$0x1] %vm305, %v239
    %314 = vst.msk [vmem:[#allocation7 + $0x20] sm:$0x1] %vm305, %v263
    %315 = vst.msk [vmem:[#allocation7 + $0x24] sm:$0x1] %vm305, %v277
    %316 = vst.msk [vmem:[#allocation7 + $0x28] sm:$0x1] %vm305, %v285
    %317 = vst.msk [vmem:[#allocation7 + $0x2c] sm:$0x1] %vm305, %v287
    %318 = vst.msk [vmem:[#allocation7 + $0x30] sm:$0x1] %vm305, %v270
    %319 = vst.msk [vmem:[#allocation7 + $0x34] sm:$0x1] %vm305, %v284
    %320 = vst.msk [vmem:[#allocation7 + $0x38] sm:$0x1] %vm305, %v286
    %321 = vst.msk [vmem:[#allocation7 + $0x3c] sm:$0x1] %vm305, %v288
    %v322 = vld [vmem:[#allocation2 + $0x1] sm:$0x1]
    %v323 = vld [vmem:[#allocation2 + $0x5] sm:$0x1]
    %v324 = vld [vmem:[#allocation2 + $0x9] sm:$0x1]
    %v325 = vld [vmem:[#allocation2 + $0xd] sm:$0x1]
    %v326 = vld [vmem:[#allocation2 + $0x11] sm:$0x1]
    %v327 = vld [vmem:[#allocation2 + $0x15] sm:$0x1]
    %v328 = vld [vmem:[#allocation2 + $0x19] sm:$0x1]
    %v329 = vld [vmem:[#allocation2 + $0x1d] sm:$0x1]
    %v330 = vld [vmem:[#allocation2 + $0x21] sm:$0x1]
    %v331 = vld [vmem:[#allocation2 + $0x25] sm:$0x1]
    %v332 = vld [vmem:[#allocation2 + $0x29] sm:$0x1]
    %v333 = vld [vmem:[#allocation2 + $0x2d] sm:$0x1]
    %v334 = vld [vmem:[#allocation2 + $0x31] sm:$0x1]
    %v335 = vld [vmem:[#allocation2 + $0x35] sm:$0x1]
    %v336 = vld [vmem:[#allocation2 + $0x39] sm:$0x1]
    %v337 = vld [vmem:[#allocation2 + $0x3d] sm:$0x1]
    %s338 = scalar_lea.vmem [#allocation5], 16
    %v339 = vld [vmem:[%s338] sm:$0xff]
    %v340 = vld [vmem:[%s338 + $0x8] sm:$0xff]
    %v357 = vrot.slane %v323, 7
    %v358 = vsel %vm75, %v357, %v322
    %v359 = vrot.slane %v324, 6
    %v360 = vsel %vm78, %v359, %v358
    %v361 = vrot.slane %v325, 5
    %v362 = vsel %vm81, %v361, %v360
    %v363 = vrot.slane %v326, 4
    %v364 = vsel %vm84, %v363, %v362
    %v365 = vrot.slane %v327, 3
    %v366 = vsel %vm87, %v365, %v364
    %v367 = vrot.slane %v328, 2
    %v368 = vsel %vm90, %v367, %v366
    %v369 = vrot.slane %v329, 1
    %v370 = vsel %vm93, %v369, %v368
    %v371 = vrot.slane %v331, 7
    %v372 = vsel %vm75, %v371, %v330
    %v373 = vrot.slane %v332, 6
    %v374 = vsel %vm78, %v373, %v372
    %v375 = vrot.slane %v333, 5
    %v376 = vsel %vm81, %v375, %v374
    %v377 = vrot.slane %v334, 4
    %v378 = vsel %vm84, %v377, %v376
    %v379 = vrot.slane %v335, 3
    %v380 = vsel %vm87, %v379, %v378
    %v381 = vrot.slane %v336, 2
    %v382 = vsel %vm90, %v381, %v380
    %v383 = vrot.slane %v337, 1
    %v384 = vsel %vm93, %v383, %v382
    %v385 = vsel %vm109, %v370, 0
    %v387 = vsel %vm109, %v384, 0
    %389 = vmatprep.subr.mxu0 0.0
    %390 = vmatpush1.msra.mxu0 0.0
    %391 = vmatprep.subr.mxu0 0.0
    %392 = vmatpush1.msra.mxu0 0.0
    %393 = vmatprep.subr.mxu0 0.0
    %394 = vmatpush1.msra.mxu0 0.0
    %395 = vmatprep.subr.mxu0 0.0
    %396 = vmatpush1.msra.mxu0 0.0
    %397 = vmatprep.subr.mxu0 0.0
    %398 = vmatpush1.msra.mxu0 0.0
    %399 = vmatprep.subr.mxu0 0.0
    %400 = vmatpush1.msra.mxu0 0.0
    %401 = vmatprep.subr.mxu0 0.0
    %402 = vmatpush1.msra.mxu0 0.0
    %403 = vmatprep.subr.mxu0 0.0
    %404 = vmatpush1.msra.mxu0 0.0
    %405 = vmatprep.subr.mxu0 0.0
    %406 = vmatpush1.msra.mxu0 0.0
    %407 = vmatprep.subr.mxu0 0.0
    %408 = vmatpush1.msra.mxu0 0.0
    %409 = vmatprep.subr.mxu0 0.0
    %410 = vmatpush1.msra.mxu0 0.0
    %411 = vmatprep.subr.mxu0 0.0
    %412 = vmatpush1.msra.mxu0 0.0
    %413 = vmatprep.subr.mxu0 0.0
    %414 = vmatpush1.msra.mxu0 0.0
    %415 = vmatprep.subr.mxu0 0.0
    %416 = vmatpush1.msra.mxu0 0.0
    %417 = vmatprep.subr.mxu0 0.0
    %418 = vmatpush1.msra.mxu0 %v340
    %419 = vmatprep.subr.mxu0 0.0
    %420 = vmatpush1.msra.mxu0 %v339
    %421 = vmatprep.subr.mxu0 0.0
    %422 = vmatpush2.msra.mxu0 0.0
    %423 = vmatprep.subr.mxu0 0.0
    %424 = vmatpush2.msra.mxu0 0.0
    %425 = vmatprep.subr.mxu0 0.0
    %426 = vmatpush2.msra.mxu0 0.0
    %427 = vmatprep.subr.mxu0 0.0
    %428 = vmatpush2.msra.mxu0 0.0
    %429 = vmatprep.subr.mxu0 0.0
    %430 = vmatpush2.msra.mxu0 0.0
    %431 = vmatprep.subr.mxu0 0.0
    %432 = vmatpush2.msra.mxu0 0.0
    %433 = vmatprep.subr.mxu0 0.0
    %434 = vmatpush2.msra.mxu0 0.0
    %435 = vmatprep.subr.mxu0 0.0
    %436 = vmatpush2.msra.mxu0 0.0
    %437 = vmatprep.subr.mxu0 0.0
    %438 = vmatpush2.msra.mxu0 0.0
    %439 = vmatprep.subr.mxu0 0.0
    %440 = vmatpush2.msra.mxu0 0.0
    %441 = vmatprep.subr.mxu0 0.0
    %442 = vmatpush2.msra.mxu0 0.0
    %443 = vmatprep.subr.mxu0 0.0
    %444 = vmatpush2.msra.mxu0 0.0
    %445 = vmatprep.subr.mxu0 0.0
    %446 = vmatpush2.msra.mxu0 0.0
    %447 = vmatprep.subr.mxu0 0.0
    %448 = vmatpush2.msra.mxu0 0.0
    %449 = vmatprep.subr.mxu0 0.0
    %450 = vmatpush2.msra.mxu0 0.0
    %451 = vmatprep.subr.mxu0 0.0
    %452 = vmatpush2.msra.mxu0 0.0
    %453 = vmatprep.mubr.f32.mxu0 0.0
    %454 = vmatmul.mubr.f32.gmra.mxu0 %v385
    %v455 = vpop.f32.mrf.mxu0
    %v456 = vadd.f32 0.0, %v455
    %v457 = vpop.f32.mrf.mxu0
    %458 = vmatprep.mubr.f32.mxu0 0.0
    %459 = vmatmul.mubr.f32.gmra.mxu0 %v387
    %v460 = vpop.f32.mrf.mxu0
    %v461 = vadd.f32 0.0, %v460
    %v462 = vpop.f32.mrf.mxu0
    %463 = vdwg.mxu0
    %v466 = vcombine.high %v456, %v456
    %v468 = vunpack.c.l.s4 1966171168
    %v469 = vunpack.c.0.s8 %v468
    %v470 = vlaneseq
    %v471 = vshrl.u32 %v470, 7
    %v472 = vsub.s32 %v469, %v471
    %v473 = vrot.slane %v456, %v472
    %v475 = vunpack.c.l.s4 1966171168
    %v476 = vunpack.c.0.s8 %v475
    %v477 = vlaneseq
    %v478 = vshrl.u32 %v477, 7
    %v479 = vsub.s32 %v476, %v478
    %v480 = vrot.slane %v466, %v479
    %v481 = vcombine.high %v473, %v473
    %v482 = vcombine.high %v480, %v480
    %v484 = vunpack.c.l.s4 1966171168
    %v485 = vunpack.c.0.s8 %v484
    %v486 = vlaneseq
    %v487 = vshrl.u32 %v486, 7
    %v488 = vsub.s32 %v485, %v487
    %v489 = vrot.slane %v473, %v488
    %v491 = vunpack.c.l.s4 1966171168
    %v492 = vunpack.c.0.s8 %v491
    %v493 = vlaneseq
    %v494 = vshrl.u32 %v493, 7
    %v495 = vsub.s32 %v492, %v494
    %v496 = vrot.slane %v480, %v495
    %v498 = vunpack.c.l.s4 1966171168
    %v499 = vunpack.c.0.s8 %v498
    %v500 = vlaneseq
    %v501 = vshrl.u32 %v500, 7
    %v502 = vsub.s32 %v499, %v501
    %v503 = vrot.slane %v481, %v502
    %v505 = vunpack.c.l.s4 1966171168
    %v506 = vunpack.c.0.s8 %v505
    %v507 = vlaneseq
    %v508 = vshrl.u32 %v507, 7
    %v509 = vsub.s32 %v506, %v508
    %v510 = vrot.slane %v482, %v509
    %v511 = vcombine.high %v489, %v489
    %v512 = vcombine.high %v496, %v496
    %v513 = vcombine.high %v503, %v503
    %v514 = vcombine.high %v510, %v510
    %v515 = vcombine.high %v461, %v461
    %v517 = vunpack.c.l.s4 1966171168
    %v518 = vunpack.c.0.s8 %v517
    %v519 = vlaneseq
    %v520 = vshrl.u32 %v519, 7
    %v521 = vsub.s32 %v518, %v520
    %v522 = vrot.slane %v461, %v521
    %v524 = vunpack.c.l.s4 1966171168
    %v525 = vunpack.c.0.s8 %v524
    %v526 = vlaneseq
    %v527 = vshrl.u32 %v526, 7
    %v528 = vsub.s32 %v525, %v527
    %v529 = vrot.slane %v515, %v528
    %v530 = vcombine.high %v522, %v522
    %v531 = vcombine.high %v529, %v529
    %v533 = vunpack.c.l.s4 1966171168
    %v534 = vunpack.c.0.s8 %v533
    %v535 = vlaneseq
    %v536 = vshrl.u32 %v535, 7
    %v537 = vsub.s32 %v534, %v536
    %v538 = vrot.slane %v522, %v537
    %v540 = vunpack.c.l.s4 1966171168
    %v541 = vunpack.c.0.s8 %v540
    %v542 = vlaneseq
    %v543 = vshrl.u32 %v542, 7
    %v544 = vsub.s32 %v541, %v543
    %v545 = vrot.slane %v529, %v544
    %v547 = vunpack.c.l.s4 1966171168
    %v548 = vunpack.c.0.s8 %v547
    %v549 = vlaneseq
    %v550 = vshrl.u32 %v549, 7
    %v551 = vsub.s32 %v548, %v550
    %v552 = vrot.slane %v530, %v551
    %v554 = vunpack.c.l.s4 1966171168
    %v555 = vunpack.c.0.s8 %v554
    %v556 = vlaneseq
    %v557 = vshrl.u32 %v556, 7
    %v558 = vsub.s32 %v555, %v557
    %v559 = vrot.slane %v531, %v558
    %v560 = vcombine.high %v538, %v538
    %v561 = vcombine.high %v545, %v545
    %v562 = vcombine.high %v552, %v552
    %v563 = vcombine.high %v559, %v559
    %580 = vst.msk [vmem:[#allocation7 + $0x1] sm:$0x1] %vm305, %v489
    %581 = vst.msk [vmem:[#allocation7 + $0x5] sm:$0x1] %vm305, %v503
    %582 = vst.msk [vmem:[#allocation7 + $0x9] sm:$0x1] %vm305, %v511
    %583 = vst.msk [vmem:[#allocation7 + $0xd] sm:$0x1] %vm305, %v513
    %584 = vst.msk [vmem:[#allocation7 + $0x11] sm:$0x1] %vm305, %v496
    %585 = vst.msk [vmem:[#allocation7 + $0x15] sm:$0x1] %vm305, %v510
    %586 = vst.msk [vmem:[#allocation7 + $0x19] sm:$0x1] %vm305, %v512
    %587 = vst.msk [vmem:[#allocation7 + $0x1d] sm:$0x1] %vm305, %v514
    %588 = vst.msk [vmem:[#allocation7 + $0x21] sm:$0x1] %vm305, %v538
    %589 = vst.msk [vmem:[#allocation7 + $0x25] sm:$0x1] %vm305, %v552
    %590 = vst.msk [vmem:[#allocation7 + $0x29] sm:$0x1] %vm305, %v560
    %591 = vst.msk [vmem:[#allocation7 + $0x2d] sm:$0x1] %vm305, %v562
    %592 = vst.msk [vmem:[#allocation7 + $0x31] sm:$0x1] %vm305, %v545
    %593 = vst.msk [vmem:[#allocation7 + $0x35] sm:$0x1] %vm305, %v559
    %594 = vst.msk [vmem:[#allocation7 + $0x39] sm:$0x1] %vm305, %v561
    %595 = vst.msk [vmem:[#allocation7 + $0x3d] sm:$0x1] %vm305, %v563
    %v596 = vld [vmem:[#allocation2 + $0x2] sm:$0x1]
    %v597 = vld [vmem:[#allocation2 + $0x6] sm:$0x1]
    %v598 = vld [vmem:[#allocation2 + $0xa] sm:$0x1]
    %v599 = vld [vmem:[#allocation2 + $0xe] sm:$0x1]
    %v600 = vld [vmem:[#allocation2 + $0x12] sm:$0x1]
    %v601 = vld [vmem:[#allocation2 + $0x16] sm:$0x1]
    %v602 = vld [vmem:[#allocation2 + $0x1a] sm:$0x1]
    %v603 = vld [vmem:[#allocation2 + $0x1e] sm:$0x1]
    %v604 = vld [vmem:[#allocation2 + $0x22] sm:$0x1]
    %v605 = vld [vmem:[#allocation2 + $0x26] sm:$0x1]
    %v606 = vld [vmem:[#allocation2 + $0x2a] sm:$0x1]
    %v607 = vld [vmem:[#allocation2 + $0x2e] sm:$0x1]
    %v608 = vld [vmem:[#allocation2 + $0x32] sm:$0x1]
    %v609 = vld [vmem:[#allocation2 + $0x36] sm:$0x1]
    %v610 = vld [vmem:[#allocation2 + $0x3a] sm:$0x1]
    %v611 = vld [vmem:[#allocation2 + $0x3e] sm:$0x1]
    %s612 = scalar_lea.vmem [#allocation5], 32
    %v613 = vld [vmem:[%s612] sm:$0xff]
    %v614 = vld [vmem:[%s612 + $0x8] sm:$0xff]
    %v631 = vrot.slane %v597, 7
    %v632 = vsel %vm75, %v631, %v596
    %v633 = vrot.slane %v598, 6
    %v634 = vsel %vm78, %v633, %v632
    %v635 = vrot.slane %v599, 5
    %v636 = vsel %vm81, %v635, %v634
    %v637 = vrot.slane %v600, 4
    %v638 = vsel %vm84, %v637, %v636
    %v639 = vrot.slane %v601, 3
    %v640 = vsel %vm87, %v639, %v638
    %v641 = vrot.slane %v602, 2
    %v642 = vsel %vm90, %v641, %v640
    %v643 = vrot.slane %v603, 1
    %v644 = vsel %vm93, %v643, %v642
    %v645 = vrot.slane %v605, 7
    %v646 = vsel %vm75, %v645, %v604
    %v647 = vrot.slane %v606, 6
    %v648 = vsel %vm78, %v647, %v646
    %v649 = vrot.slane %v607, 5
    %v650 = vsel %vm81, %v649, %v648
    %v651 = vrot.slane %v608, 4
    %v652 = vsel %vm84, %v651, %v650
    %v653 = vrot.slane %v609, 3
    %v654 = vsel %vm87, %v653, %v652
    %v655 = vrot.slane %v610, 2
    %v656 = vsel %vm90, %v655, %v654
    %v657 = vrot.slane %v611, 1
    %v658 = vsel %vm93, %v657, %v656
    %v659 = vsel %vm109, %v644, 0
    %v661 = vsel %vm109, %v658, 0
    %663 = vmatprep.subr.mxu0 0.0
    %664 = vmatpush1.msra.mxu0 0.0
    %665 = vmatprep.subr.mxu0 0.0
    %666 = vmatpush1.msra.mxu0 0.0
    %667 = vmatprep.subr.mxu0 0.0
    %668 = vmatpush1.msra.mxu0 0.0
    %669 = vmatprep.subr.mxu0 0.0
    %670 = vmatpush1.msra.mxu0 0.0
    %671 = vmatprep.subr.mxu0 0.0
    %672 = vmatpush1.msra.mxu0 0.0
    %673 = vmatprep.subr.mxu0 0.0
    %674 = vmatpush1.msra.mxu0 0.0
    %675 = vmatprep.subr.mxu0 0.0
    %676 = vmatpush1.msra.mxu0 0.0
    %677 = vmatprep.subr.mxu0 0.0
    %678 = vmatpush1.msra.mxu0 0.0
    %679 = vmatprep.subr.mxu0 0.0
    %680 = vmatpush1.msra.mxu0 0.0
    %681 = vmatprep.subr.mxu0 0.0
    %682 = vmatpush1.msra.mxu0 0.0
    %683 = vmatprep.subr.mxu0 0.0
    %684 = vmatpush1.msra.mxu0 0.0
    %685 = vmatprep.subr.mxu0 0.0
    %686 = vmatpush1.msra.mxu0 0.0
    %687 = vmatprep.subr.mxu0 0.0
    %688 = vmatpush1.msra.mxu0 0.0
    %689 = vmatprep.subr.mxu0 0.0
    %690 = vmatpush1.msra.mxu0 0.0
    %691 = vmatprep.subr.mxu0 0.0
    %692 = vmatpush1.msra.mxu0 %v614
    %693 = vmatprep.subr.mxu0 0.0
    %694 = vmatpush1.msra.mxu0 %v613
    %695 = vmatprep.subr.mxu0 0.0
    %696 = vmatpush2.msra.mxu0 0.0
    %697 = vmatprep.subr.mxu0 0.0
    %698 = vmatpush2.msra.mxu0 0.0
    %699 = vmatprep.subr.mxu0 0.0
    %700 = vmatpush2.msra.mxu0 0.0
    %701 = vmatprep.subr.mxu0 0.0
    %702 = vmatpush2.msra.mxu0 0.0
    %703 = vmatprep.subr.mxu0 0.0
    %704 = vmatpush2.msra.mxu0 0.0
    %705 = vmatprep.subr.mxu0 0.0
    %706 = vmatpush2.msra.mxu0 0.0
    %707 = vmatprep.subr.mxu0 0.0
    %708 = vmatpush2.msra.mxu0 0.0
    %709 = vmatprep.subr.mxu0 0.0
    %710 = vmatpush2.msra.mxu0 0.0
    %711 = vmatprep.subr.mxu0 0.0
    %712 = vmatpush2.msra.mxu0 0.0
    %713 = vmatprep.subr.mxu0 0.0
    %714 = vmatpush2.msra.mxu0 0.0
    %715 = vmatprep.subr.mxu0 0.0
    %716 = vmatpush2.msra.mxu0 0.0
    %717 = vmatprep.subr.mxu0 0.0
    %718 = vmatpush2.msra.mxu0 0.0
    %719 = vmatprep.subr.mxu0 0.0
    %720 = vmatpush2.msra.mxu0 0.0
    %721 = vmatprep.subr.mxu0 0.0
    %722 = vmatpush2.msra.mxu0 0.0
    %723 = vmatprep.subr.mxu0 0.0
    %724 = vmatpush2.msra.mxu0 0.0
    %725 = vmatprep.subr.mxu0 0.0
    %726 = vmatpush2.msra.mxu0 0.0
    %727 = vmatprep.mubr.f32.mxu0 0.0
    %728 = vmatmul.mubr.f32.gmra.mxu0 %v659
    %v729 = vpop.f32.mrf.mxu0
    %v730 = vadd.f32 0.0, %v729
    %v731 = vpop.f32.mrf.mxu0
    %732 = vmatprep.mubr.f32.mxu0 0.0
    %733 = vmatmul.mubr.f32.gmra.mxu0 %v661
    %v734 = vpop.f32.mrf.mxu0
    %v735 = vadd.f32 0.0, %v734
    %v736 = vpop.f32.mrf.mxu0
    %737 = vdwg.mxu0
    %v740 = vcombine.high %v730, %v730
    %v742 = vunpack.c.l.s4 1966171168
    %v743 = vunpack.c.0.s8 %v742
    %v744 = vlaneseq
    %v745 = vshrl.u32 %v744, 7
    %v746 = vsub.s32 %v743, %v745
    %v747 = vrot.slane %v730, %v746
    %v749 = vunpack.c.l.s4 1966171168
    %v750 = vunpack.c.0.s8 %v749
    %v751 = vlaneseq
    %v752 = vshrl.u32 %v751, 7
    %v753 = vsub.s32 %v750, %v752
    %v754 = vrot.slane %v740, %v753
    %v755 = vcombine.high %v747, %v747
    %v756 = vcombine.high %v754, %v754
    %v758 = vunpack.c.l.s4 1966171168
    %v759 = vunpack.c.0.s8 %v758
    %v760 = vlaneseq
    %v761 = vshrl.u32 %v760, 7
    %v762 = vsub.s32 %v759, %v761
    %v763 = vrot.slane %v747, %v762
    %v765 = vunpack.c.l.s4 1966171168
    %v766 = vunpack.c.0.s8 %v765
    %v767 = vlaneseq
    %v768 = vshrl.u32 %v767, 7
    %v769 = vsub.s32 %v766, %v768
    %v770 = vrot.slane %v754, %v769
    %v772 = vunpack.c.l.s4 1966171168
    %v773 = vunpack.c.0.s8 %v772
    %v774 = vlaneseq
    %v775 = vshrl.u32 %v774, 7
    %v776 = vsub.s32 %v773, %v775
    %v777 = vrot.slane %v755, %v776
    %v779 = vunpack.c.l.s4 1966171168
    %v780 = vunpack.c.0.s8 %v779
    %v781 = vlaneseq
    %v782 = vshrl.u32 %v781, 7
    %v783 = vsub.s32 %v780, %v782
    %v784 = vrot.slane %v756, %v783
    %v785 = vcombine.high %v763, %v763
    %v786 = vcombine.high %v770, %v770
    %v787 = vcombine.high %v777, %v777
    %v788 = vcombine.high %v784, %v784
    %v789 = vcombine.high %v735, %v735
    %v791 = vunpack.c.l.s4 1966171168
    %v792 = vunpack.c.0.s8 %v791
    %v793 = vlaneseq
    %v794 = vshrl.u32 %v793, 7
    %v795 = vsub.s32 %v792, %v794
    %v796 = vrot.slane %v735, %v795
    %v798 = vunpack.c.l.s4 1966171168
    %v799 = vunpack.c.0.s8 %v798
    %v800 = vlaneseq
    %v801 = vshrl.u32 %v800, 7
    %v802 = vsub.s32 %v799, %v801
    %v803 = vrot.slane %v789, %v802
    %v804 = vcombine.high %v796, %v796
    %v805 = vcombine.high %v803, %v803
    %v807 = vunpack.c.l.s4 1966171168
    %v808 = vunpack.c.0.s8 %v807
    %v809 = vlaneseq
    %v810 = vshrl.u32 %v809, 7
    %v811 = vsub.s32 %v808, %v810
    %v812 = vrot.slane %v796, %v811
    %v814 = vunpack.c.l.s4 1966171168
    %v815 = vunpack.c.0.s8 %v814
    %v816 = vlaneseq
    %v817 = vshrl.u32 %v816, 7
    %v818 = vsub.s32 %v815, %v817
    %v819 = vrot.slane %v803, %v818
    %v821 = vunpack.c.l.s4 1966171168
    %v822 = vunpack.c.0.s8 %v821
    %v823 = vlaneseq
    %v824 = vshrl.u32 %v823, 7
    %v825 = vsub.s32 %v822, %v824
    %v826 = vrot.slane %v804, %v825
    %v828 = vunpack.c.l.s4 1966171168
    %v829 = vunpack.c.0.s8 %v828
    %v830 = vlaneseq
    %v831 = vshrl.u32 %v830, 7
    %v832 = vsub.s32 %v829, %v831
    %v833 = vrot.slane %v805, %v832
    %v834 = vcombine.high %v812, %v812
    %v835 = vcombine.high %v819, %v819
    %v836 = vcombine.high %v826, %v826
    %v837 = vcombine.high %v833, %v833
    %854 = vst.msk [vmem:[#allocation7 + $0x2] sm:$0x1] %vm305, %v763
    %855 = vst.msk [vmem:[#allocation7 + $0x6] sm:$0x1] %vm305, %v777
    %856 = vst.msk [vmem:[#allocation7 + $0xa] sm:$0x1] %vm305, %v785
    %857 = vst.msk [vmem:[#allocation7 + $0xe] sm:$0x1] %vm305, %v787
    %858 = vst.msk [vmem:[#allocation7 + $0x12] sm:$0x1] %vm305, %v770
    %859 = vst.msk [vmem:[#allocation7 + $0x16] sm:$0x1] %vm305, %v784
    %860 = vst.msk [vmem:[#allocation7 + $0x1a] sm:$0x1] %vm305, %v786
    %861 = vst.msk [vmem:[#allocation7 + $0x1e] sm:$0x1] %vm305, %v788
    %862 = vst.msk [vmem:[#allocation7 + $0x22] sm:$0x1] %vm305, %v812
    %863 = vst.msk [vmem:[#allocation7 + $0x26] sm:$0x1] %vm305, %v826
    %864 = vst.msk [vmem:[#allocation7 + $0x2a] sm:$0x1] %vm305, %v834
    %865 = vst.msk [vmem:[#allocation7 + $0x2e] sm:$0x1] %vm305, %v836
    %866 = vst.msk [vmem:[#allocation7 + $0x32] sm:$0x1] %vm305, %v819
    %867 = vst.msk [vmem:[#allocation7 + $0x36] sm:$0x1] %vm305, %v833
    %868 = vst.msk [vmem:[#allocation7 + $0x3a] sm:$0x1] %vm305, %v835
    %869 = vst.msk [vmem:[#allocation7 + $0x3e] sm:$0x1] %vm305, %v837
    %v870 = vld [vmem:[#allocation2 + $0x3] sm:$0x1]
    %v871 = vld [vmem:[#allocation2 + $0x7] sm:$0x1]
    %v872 = vld [vmem:[#allocation2 + $0xb] sm:$0x1]
    %v873 = vld [vmem:[#allocation2 + $0xf] sm:$0x1]
    %v874 = vld [vmem:[#allocation2 + $0x13] sm:$0x1]
    %v875 = vld [vmem:[#allocation2 + $0x17] sm:$0x1]
    %v876 = vld [vmem:[#allocation2 + $0x1b] sm:$0x1]
    %v877 = vld [vmem:[#allocation2 + $0x1f] sm:$0x1]
    %v878 = vld [vmem:[#allocation2 + $0x23] sm:$0x1]
    %v879 = vld [vmem:[#allocation2 + $0x27] sm:$0x1]
    %v880 = vld [vmem:[#allocation2 + $0x2b] sm:$0x1]
    %v881 = vld [vmem:[#allocation2 + $0x2f] sm:$0x1]
    %v882 = vld [vmem:[#allocation2 + $0x33] sm:$0x1]
    %v883 = vld [vmem:[#allocation2 + $0x37] sm:$0x1]
    %v884 = vld [vmem:[#allocation2 + $0x3b] sm:$0x1]
    %v885 = vld [vmem:[#allocation2 + $0x3f] sm:$0x1]
    %s886 = scalar_lea.vmem [#allocation5], 48
    %v887 = vld [vmem:[%s886] sm:$0xff]
    %v888 = vld [vmem:[%s886 + $0x8] sm:$0xff]
    %v905 = vrot.slane %v871, 7
    %v906 = vsel %vm75, %v905, %v870
    %v907 = vrot.slane %v872, 6
    %v908 = vsel %vm78, %v907, %v906
    %v909 = vrot.slane %v873, 5
    %v910 = vsel %vm81, %v909, %v908
    %v911 = vrot.slane %v874, 4
    %v912 = vsel %vm84, %v911, %v910
    %v913 = vrot.slane %v875, 3
    %v914 = vsel %vm87, %v913, %v912
    %v915 = vrot.slane %v876, 2
    %v916 = vsel %vm90, %v915, %v914
    %v917 = vrot.slane %v877, 1
    %v918 = vsel %vm93, %v917, %v916
    %v919 = vrot.slane %v879, 7
    %v920 = vsel %vm75, %v919, %v878
    %v921 = vrot.slane %v880, 6
    %v922 = vsel %vm78, %v921, %v920
    %v923 = vrot.slane %v881, 5
    %v924 = vsel %vm81, %v923, %v922
    %v925 = vrot.slane %v882, 4
    %v926 = vsel %vm84, %v925, %v924
    %v927 = vrot.slane %v883, 3
    %v928 = vsel %vm87, %v927, %v926
    %v929 = vrot.slane %v884, 2
    %v930 = vsel %vm90, %v929, %v928
    %v931 = vrot.slane %v885, 1
    %v932 = vsel %vm93, %v931, %v930
    %v933 = vsel %vm109, %v918, 0
    %v935 = vsel %vm109, %v932, 0
    %937 = vmatprep.subr.mxu0 0.0
    %938 = vmatpush1.msra.mxu0 0.0
    %939 = vmatprep.subr.mxu0 0.0
    %940 = vmatpush1.msra.mxu0 0.0
    %941 = vmatprep.subr.mxu0 0.0
    %942 = vmatpush1.msra.mxu0 0.0
    %943 = vmatprep.subr.mxu0 0.0
    %944 = vmatpush1.msra.mxu0 0.0
    %945 = vmatprep.subr.mxu0 0.0
    %946 = vmatpush1.msra.mxu0 0.0
    %947 = vmatprep.subr.mxu0 0.0
    %948 = vmatpush1.msra.mxu0 0.0
    %949 = vmatprep.subr.mxu0 0.0
    %950 = vmatpush1.msra.mxu0 0.0
    %951 = vmatprep.subr.mxu0 0.0
    %952 = vmatpush1.msra.mxu0 0.0
    %953 = vmatprep.subr.mxu0 0.0
    %954 = vmatpush1.msra.mxu0 0.0
    %955 = vmatprep.subr.mxu0 0.0
    %956 = vmatpush1.msra.mxu0 0.0
    %957 = vmatprep.subr.mxu0 0.0
    %958 = vmatpush1.msra.mxu0 0.0
    %959 = vmatprep.subr.mxu0 0.0
    %960 = vmatpush1.msra.mxu0 0.0
    %961 = vmatprep.subr.mxu0 0.0
    %962 = vmatpush1.msra.mxu0 0.0
    %963 = vmatprep.subr.mxu0 0.0
    %964 = vmatpush1.msra.mxu0 0.0
    %965 = vmatprep.subr.mxu0 0.0
    %966 = vmatpush1.msra.mxu0 %v888
    %967 = vmatprep.subr.mxu0 0.0
    %968 = vmatpush1.msra.mxu0 %v887
    %969 = vmatprep.subr.mxu0 0.0
    %970 = vmatpush2.msra.mxu0 0.0
    %971 = vmatprep.subr.mxu0 0.0
    %972 = vmatpush2.msra.mxu0 0.0
    %973 = vmatprep.subr.mxu0 0.0
    %974 = vmatpush2.msra.mxu0 0.0
    %975 = vmatprep.subr.mxu0 0.0
    %976 = vmatpush2.msra.mxu0 0.0
    %977 = vmatprep.subr.mxu0 0.0
    %978 = vmatpush2.msra.mxu0 0.0
    %979 = vmatprep.subr.mxu0 0.0
    %980 = vmatpush2.msra.mxu0 0.0
    %981 = vmatprep.subr.mxu0 0.0
    %982 = vmatpush2.msra.mxu0 0.0
    %983 = vmatprep.subr.mxu0 0.0
    %984 = vmatpush2.msra.mxu0 0.0
    %985 = vmatprep.subr.mxu0 0.0
    %986 = vmatpush2.msra.mxu0 0.0
    %987 = vmatprep.subr.mxu0 0.0
    %988 = vmatpush2.msra.mxu0 0.0
    %989 = vmatprep.subr.mxu0 0.0
    %990 = vmatpush2.msra.mxu0 0.0
    %991 = vmatprep.subr.mxu0 0.0
    %992 = vmatpush2.msra.mxu0 0.0
    %993 = vmatprep.subr.mxu0 0.0
    %994 = vmatpush2.msra.mxu0 0.0
    %995 = vmatprep.subr.mxu0 0.0
    %996 = vmatpush2.msra.mxu0 0.0
    %997 = vmatprep.subr.mxu0 0.0
    %998 = vmatpush2.msra.mxu0 0.0
    %999 = vmatprep.subr.mxu0 0.0
    %1000 = vmatpush2.msra.mxu0 0.0
    %1001 = vmatprep.mubr.f32.mxu0 0.0
    %1002 = vmatmul.mubr.f32.gmra.mxu0 %v933
    %v1003 = vpop.f32.mrf.mxu0
    %v1004 = vadd.f32 0.0, %v1003
    %v1005 = vpop.f32.mrf.mxu0
    %1006 = vmatprep.mubr.f32.mxu0 0.0
    %1007 = vmatmul.mubr.f32.gmra.mxu0 %v935
    %v1008 = vpop.f32.mrf.mxu0
    %v1009 = vadd.f32 0.0, %v1008
    %v1010 = vpop.f32.mrf.mxu0
    %1011 = vdwg.mxu0
    %v1014 = vcombine.high %v1004, %v1004
    %v1016 = vunpack.c.l.s4 1966171168
    %v1017 = vunpack.c.0.s8 %v1016
    %v1018 = vlaneseq
    %v1019 = vshrl.u32 %v1018, 7
    %v1020 = vsub.s32 %v1017, %v1019
    %v1021 = vrot.slane %v1004, %v1020
    %v1023 = vunpack.c.l.s4 1966171168
    %v1024 = vunpack.c.0.s8 %v1023
    %v1025 = vlaneseq
    %v1026 = vshrl.u32 %v1025, 7
    %v1027 = vsub.s32 %v1024, %v1026
    %v1028 = vrot.slane %v1014, %v1027
    %v1029 = vcombine.high %v1021, %v1021
    %v1030 = vcombine.high %v1028, %v1028
    %v1032 = vunpack.c.l.s4 1966171168
    %v1033 = vunpack.c.0.s8 %v1032
    %v1034 = vlaneseq
    %v1035 = vshrl.u32 %v1034, 7
    %v1036 = vsub.s32 %v1033, %v1035
    %v1037 = vrot.slane %v1021, %v1036
    %v1039 = vunpack.c.l.s4 1966171168
    %v1040 = vunpack.c.0.s8 %v1039
    %v1041 = vlaneseq
    %v1042 = vshrl.u32 %v1041, 7
    %v1043 = vsub.s32 %v1040, %v1042
    %v1044 = vrot.slane %v1028, %v1043
    %v1046 = vunpack.c.l.s4 1966171168
    %v1047 = vunpack.c.0.s8 %v1046
    %v1048 = vlaneseq
    %v1049 = vshrl.u32 %v1048, 7
    %v1050 = vsub.s32 %v1047, %v1049
    %v1051 = vrot.slane %v1029, %v1050
    %v1053 = vunpack.c.l.s4 1966171168
    %v1054 = vunpack.c.0.s8 %v1053
    %v1055 = vlaneseq
    %v1056 = vshrl.u32 %v1055, 7
    %v1057 = vsub.s32 %v1054, %v1056
    %v1058 = vrot.slane %v1030, %v1057
    %v1059 = vcombine.high %v1037, %v1037
    %v1060 = vcombine.high %v1044, %v1044
    %v1061 = vcombine.high %v1051, %v1051
    %v1062 = vcombine.high %v1058, %v1058
    %v1063 = vcombine.high %v1009, %v1009
    %v1065 = vunpack.c.l.s4 1966171168
    %v1066 = vunpack.c.0.s8 %v1065
    %v1067 = vlaneseq
    %v1068 = vshrl.u32 %v1067, 7
    %v1069 = vsub.s32 %v1066, %v1068
    %v1070 = vrot.slane %v1009, %v1069
    %v1072 = vunpack.c.l.s4 1966171168
    %v1073 = vunpack.c.0.s8 %v1072
    %v1074 = vlaneseq
    %v1075 = vshrl.u32 %v1074, 7
    %v1076 = vsub.s32 %v1073, %v1075
    %v1077 = vrot.slane %v1063, %v1076
    %v1078 = vcombine.high %v1070, %v1070
    %v1079 = vcombine.high %v1077, %v1077
    %v1081 = vunpack.c.l.s4 1966171168
    %v1082 = vunpack.c.0.s8 %v1081
    %v1083 = vlaneseq
    %v1084 = vshrl.u32 %v1083, 7
    %v1085 = vsub.s32 %v1082, %v1084
    %v1086 = vrot.slane %v1070, %v1085
    %v1088 = vunpack.c.l.s4 1966171168
    %v1089 = vunpack.c.0.s8 %v1088
    %v1090 = vlaneseq
    %v1091 = vshrl.u32 %v1090, 7
    %v1092 = vsub.s32 %v1089, %v1091
    %v1093 = vrot.slane %v1077, %v1092
    %v1095 = vunpack.c.l.s4 1966171168
    %v1096 = vunpack.c.0.s8 %v1095
    %v1097 = vlaneseq
    %v1098 = vshrl.u32 %v1097, 7
    %v1099 = vsub.s32 %v1096, %v1098
    %v1100 = vrot.slane %v1078, %v1099
    %v1102 = vunpack.c.l.s4 1966171168
    %v1103 = vunpack.c.0.s8 %v1102
    %v1104 = vlaneseq
    %v1105 = vshrl.u32 %v1104, 7
    %v1106 = vsub.s32 %v1103, %v1105
    %v1107 = vrot.slane %v1079, %v1106
    %v1108 = vcombine.high %v1086, %v1086
    %v1109 = vcombine.high %v1093, %v1093
    %v1110 = vcombine.high %v1100, %v1100
    %v1111 = vcombine.high %v1107, %v1107
    %1128 = vst.msk [vmem:[#allocation7 + $0x3] sm:$0x1] %vm305, %v1037
    %1129 = vst.msk [vmem:[#allocation7 + $0x7] sm:$0x1] %vm305, %v1051
    %1130 = vst.msk [vmem:[#allocation7 + $0xb] sm:$0x1] %vm305, %v1059
    %1131 = vst.msk [vmem:[#allocation7 + $0xf] sm:$0x1] %vm305, %v1061
    %1132 = vst.msk [vmem:[#allocation7 + $0x13] sm:$0x1] %vm305, %v1044
    %1133 = vst.msk [vmem:[#allocation7 + $0x17] sm:$0x1] %vm305, %v1058
    %1134 = vst.msk [vmem:[#allocation7 + $0x1b] sm:$0x1] %vm305, %v1060
    %1135 = vst.msk [vmem:[#allocation7 + $0x1f] sm:$0x1] %vm305, %v1062
    %1136 = vst.msk [vmem:[#allocation7 + $0x23] sm:$0x1] %vm305, %v1086
    %1137 = vst.msk [vmem:[#allocation7 + $0x27] sm:$0x1] %vm305, %v1100
    %1138 = vst.msk [vmem:[#allocation7 + $0x2b] sm:$0x1] %vm305, %v1108
    %1139 = vst.msk [vmem:[#allocation7 + $0x2f] sm:$0x1] %vm305, %v1110
    %1140 = vst.msk [vmem:[#allocation7 + $0x33] sm:$0x1] %vm305, %v1093
    %1141 = vst.msk [vmem:[#allocation7 + $0x37] sm:$0x1] %vm305, %v1107
    %1142 = vst.msk [vmem:[#allocation7 + $0x3b] sm:$0x1] %vm305, %v1109
    %1143 = vst.msk [vmem:[#allocation7 + $0x3f] sm:$0x1] %vm305, %v1111
    // Predicated region
    $region18: #{tpu_custom_call.1} parent=1 // pred_check
      _
    $region19: #{tpu_custom_call.1} parent=1 // pred_check_branch
      %1145 = sbr.rel (0) target = $region21
    $region20: #{tpu_custom_call.1} parent=1 // pred_region
      %s1147 = ssub.s32 1024, 1024
      %1148 = vsyncadd [#allocation4], %s1147
      %s1149 = sshll.u32 [#allocation7], 4
      %s1150 = int_to_ptr.vmem [resolvable:$true] %s1149
      %1155 = dma.vmem_to_hbm [thread:$0]  %s1150, 1024, %s2, [#allocation4], 64, 64, 4
    $region21: #{tpu_custom_call.1} parent=1 // pred_fallthru
      _
    // Predicated region
    $region22: #{tpu_custom_call.1} parent=1 // pred_check
      _
    $region23: #{tpu_custom_call.1} parent=1 // pred_check_branch
      %1157 = sbr.rel (0) target = $region25
    $region24: #{tpu_custom_call.1} parent=1 // pred_region
      %1158 = dma.done [#allocation4], 1024
    $region25: #{tpu_custom_call.1} parent=1 // pred_fallthru
      _
    %1159 = vsyncpa [#allocation3], 1
    %1160 = vsyncpa [#allocation6], 1
    %1161 = vsyncpa [#allocation4], 1

</llo_original>
